<compile_context>
chip_gen: v6e
topology: v6e:2x2x1
jax: 0.10.0
libtpu: 0.0.40
codegen_flags: <defaults>
</compile_context>

<pallas_src>
import jax
import jax.numpy as jnp
from jax.experimental import pallas as pl
from jax.experimental.pallas import tpu as pltpu


def _round_up(x, m):
    return (x + m - 1) // m * m


def dqn_kernel(xT_ref, w1T_ref, b1_ref, w2T_ref, b2_ref, oT_ref):
    """One batch tile of the transposed DQN forward.

      xT_ref : [S, Bt]   compute dtype (bf16 fast path)  -- batch on lanes
      w1T_ref: [H, S]    compute dtype  (VMEM-resident across the grid)
      b1_ref : [H, 1]    f32
      w2T_ref: [A, H]    compute dtype  (VMEM-resident across the grid)
      b2_ref : [A, 1]    f32
      oT_ref : [A, Bt]   f32           -- lane-dense output stores
    """
    # fc1 (transposed): h^T = W1^T @ x^T, f32 accumulation on the MXU.
    h = jnp.dot(w1T_ref[...], xT_ref[...], preferred_element_type=jnp.float32)
    # Bias + ReLU in f32 on the VPU; b1 [H,1] broadcasts along the lane axis.
    h = jnp.maximum(h + b1_ref[...], 0.0)
    # fc2 (transposed): DELIBERATE downcast of the ReLU activations to the
    # MXU compute dtype (bf16 on the fast path), f32 accumulation.
    out = jnp.dot(w2T_ref[...], h.astype(w2T_ref.dtype),
                  preferred_element_type=jnp.float32)
    oT_ref[...] = (out + b2_ref[...]).astype(oT_ref.dtype)


def dqn_forward(x, w1, b1, w2, b2, *, block_b=256,
                compute_dtype=jnp.bfloat16):
    """y = relu(x @ w1 + b1) @ w2 + b2 as one batched Pallas kernel.

      x : [B, S] float32
      w1: [S, H], b1: [H], w2: [H, A], b2: [A]  (float32 master params)
    Returns [B, A] float32.
    """
    B, S = x.shape
    H = w1.shape[1]
    A = w2.shape[1]

    # Lane-dense batch tiling: batch sits on the 128-wide lane axis.
    block_b = max(128, (block_b // 128) * 128)
    block_b = min(block_b, _round_up(B, 128))
    Bp = _round_up(B, block_b)

    # Layout plumbing (cheap, outside the kernel): transpose so the large
    # batch axis is the lane axis, pad batch to the tile size, cast MXU
    # operands to the compute dtype, keep biases in f32 for the f32 epilogue.
    if Bp != B:
        x = jnp.pad(x, ((0, Bp - B), (0, 0)))
    xT = x.T.astype(compute_dtype)                    # [S, Bp]
    w1T = w1.T.astype(compute_dtype)                  # [H, S]
    w2T = w2.T.astype(compute_dtype)                  # [A, H]
    b1c = b1.reshape(H, 1).astype(jnp.float32)        # [H, 1]
    b2c = b2.reshape(A, 1).astype(jnp.float32)        # [A, 1]

    grid = (Bp // block_b,)

    oT = pl.pallas_call(
        dqn_kernel,
        out_shape=jax.ShapeDtypeStruct((A, Bp), jnp.float32),
        grid=grid,
        in_specs=[
            # Batch-tiled activation stream (pipelined / double-buffered).
            pl.BlockSpec((S, block_b), lambda i: (0, i)),
            # Weights / biases: constant index_map -> stay VMEM-resident.
            pl.BlockSpec((H, S), lambda i: (0, 0)),
            pl.BlockSpec((H, 1), lambda i: (0, 0)),
            pl.BlockSpec((A, H), lambda i: (0, 0)),
            pl.BlockSpec((A, 1), lambda i: (0, 0)),
        ],
        out_specs=pl.BlockSpec((A, block_b), lambda i: (0, i)),
        compiler_params=pltpu.CompilerParams(
            # Batch tiles are independent -> v7x megacore shards the grid.
            dimension_semantics=("parallel",),
        ),
    )(xT, w1T, b1c, w2T, b2c)

    # Undo the transposed layout and drop batch padding.
    return oT.T[:B]                                   # [B, A] float32


def init_params(key, state_size, action_size, hidden=64, dtype=jnp.float32):
    """Deterministic init matching PyTorch nn.Linear default:
    U(-1/sqrt(fan_in), 1/sqrt(fan_in)) for both weight and bias.
    Weights stored as [in_features, out_features]."""
    k1, k2, k3, k4 = jax.random.split(key, 4)
    bound1 = 1.0 / jnp.sqrt(state_size)
    bound2 = 1.0 / jnp.sqrt(hidden)
    w1 = jax.random.uniform(k1, (state_size, hidden), dtype, -bound1, bound1)
    b1 = jax.random.uniform(k2, (hidden,), dtype, -bound1, bound1)
    w2 = jax.random.uniform(k3, (hidden, action_size), dtype, -bound2, bound2)
    b2 = jax.random.uniform(k4, (action_size,), dtype, -bound2, bound2)
    return w1, b1, w2, b2


if __name__ == "__main__":
    state_size = 16
    action_size = 8
    hidden = 64

    key = jax.random.PRNGKey(0)
    kx, kp = jax.random.split(key)
    w1, b1, w2, b2 = init_params(kp, state_size, action_size, hidden)

    def ref_forward(xx):
        return jnp.maximum(xx @ w1 + b1, 0.0) @ w2 + b2

    # 1) f32 compute path, multi-tile grid -> tight numerical check.
    x = jax.random.normal(kx, (256, state_size), jnp.float32)
    out_f32 = jax.block_until_ready(
        dqn_forward(x, w1, b1, w2, b2, block_b=128,
                    compute_dtype=jnp.float32))
    assert out_f32.shape == (256, action_size)
    assert jnp.allclose(out_f32, ref_forward(x), atol=1e-4, rtol=1e-4)

    # 2) bf16 MXU fast path (f32 accumulation) + ragged batch (padding path).
    #    Loose tolerance against the f32 reference: bf16 inputs carry ~0.4%
    #    relative rounding; accumulation stays in f32.
    x2 = jax.random.normal(kx, (37, state_size), jnp.float32)
    out_bf16 = jax.block_until_ready(
        dqn_forward(x2, w1, b1, w2, b2, compute_dtype=jnp.bfloat16))
    assert out_bf16.shape == (37, action_size)
    assert jnp.allclose(out_bf16, ref_forward(x2), atol=5e-2, rtol=5e-2)

    print("KERNEL_OK")
</pallas_src>

<mosaic_0001>
module attributes {stable_mosaic.version = 11 : i64} {
  func.func @dqn_kernel(%arg0: i32, %arg1: memref<16x128xf32, #tpu.memory_space<vmem>>, %arg2: memref<64x16xf32, #tpu.memory_space<vmem>>, %arg3: memref<64x1xf32, #tpu.memory_space<vmem>>, %arg4: memref<8x64xf32, #tpu.memory_space<vmem>>, %arg5: memref<8x1xf32, #tpu.memory_space<vmem>>, %arg6: memref<8x128xf32, #tpu.memory_space<vmem>>) attributes {dimension_semantics = [#tpu.dimension_semantics<parallel>], iteration_bounds = array<i64: 2>, scalar_prefetch = 0 : i64, scratch_operands = 0 : i64, tpu.core_type = #tpu.core_type<tc>, window_params = [{transform_indices = @transform_0, window_bounds = array<i64: 16, 128>}, {pipeline_mode = #tpu.pipeline_mode<synchronous>, transform_indices = @transform_1, window_bounds = array<i64: 64, 16>}, {pipeline_mode = #tpu.pipeline_mode<synchronous>, transform_indices = @transform_2, window_bounds = array<i64: 64, 1>}, {pipeline_mode = #tpu.pipeline_mode<synchronous>, transform_indices = @transform_3, window_bounds = array<i64: 8, 64>}, {pipeline_mode = #tpu.pipeline_mode<synchronous>, transform_indices = @transform_4, window_bounds = array<i64: 8, 1>}, {transform_indices = @transform_5, window_bounds = array<i64: 8, 128>}]} {
    %c0 = arith.constant 0 : index
    %c0_0 = arith.constant 0 : index
    %0 = vector.load %arg2[%c0, %c0_0] : memref<64x16xf32, #tpu.memory_space<vmem>>, vector<64x16xf32>
    %c0_1 = arith.constant 0 : index
    %c0_2 = arith.constant 0 : index
    %1 = vector.load %arg1[%c0_1, %c0_2] : memref<16x128xf32, #tpu.memory_space<vmem>>, vector<16x128xf32>
    %cst = arith.constant dense<0.000000e+00> : vector<64x128xf32>
    %2 = tpu.matmul %0, %1, %cst {dimension_numbers = #tpu.dot_dimension_numbers<[1], [0], [0], [1], [0, 0, 1, 1], [], []>} : vector<64x16xf32>, vector<16x128xf32>, vector<64x128xf32> -> vector<64x128xf32>
    %c0_3 = arith.constant 0 : index
    %c0_4 = arith.constant 0 : index
    %3 = vector.load %arg3[%c0_3, %c0_4] : memref<64x1xf32, #tpu.memory_space<vmem>>, vector<64x1xf32>
    %4 = vector.broadcast %3 : vector<64x1xf32> to vector<64x128xf32>
    %5 = arith.addf %2, %4 : vector<64x128xf32>
    %cst_5 = arith.constant 0.000000e+00 : f32
    %6 = vector.broadcast %cst_5 : f32 to vector<64x128xf32>
    %7 = arith.maximumf %5, %6 : vector<64x128xf32>
    %c0_6 = arith.constant 0 : index
    %c0_7 = arith.constant 0 : index
    %8 = vector.load %arg4[%c0_6, %c0_7] : memref<8x64xf32, #tpu.memory_space<vmem>>, vector<8x64xf32>
    %cst_8 = arith.constant dense<0.000000e+00> : vector<8x128xf32>
    %9 = tpu.matmul %8, %7, %cst_8 {dimension_numbers = #tpu.dot_dimension_numbers<[1], [0], [0], [1], [0, 0, 1, 1], [], []>} : vector<8x64xf32>, vector<64x128xf32>, vector<8x128xf32> -> vector<8x128xf32>
    %c0_9 = arith.constant 0 : index
    %c0_10 = arith.constant 0 : index
    %10 = vector.load %arg5[%c0_9, %c0_10] : memref<8x1xf32, #tpu.memory_space<vmem>>, vector<8x1xf32>
    %11 = vector.broadcast %10 : vector<8x1xf32> to vector<8x128xf32>
    %12 = arith.addf %9, %11 : vector<8x128xf32>
    %c0_11 = arith.constant 0 : index
    %c0_12 = arith.constant 0 : index
    %13 = vector.load %arg6[%c0_11, %c0_12] : memref<8x128xf32, #tpu.memory_space<vmem>>, vector<8x128xf32>
    tpu.vector_store %arg6[%c0_11, %c0_12], %12 {strides = array<i32>} : memref<8x128xf32, #tpu.memory_space<vmem>>, vector<8x128xf32>,
    return
  }
  func.func @transform_0(%arg0: i32) -> (i32, i32) {
    %c0_i32 = arith.constant 0 : i32
    %c0_i32_0 = arith.constant 0 : i32
    return %c0_i32, %arg0 : i32, i32
  }
  func.func @transform_1(%arg0: i32) -> (i32, i32) {
    %c0_i32 = arith.constant 0 : i32
    %c0_i32_0 = arith.constant 0 : i32
    %c0_i32_1 = arith.constant 0 : i32
    return %c0_i32, %c0_i32_0 : i32, i32
  }
  func.func @transform_2(%arg0: i32) -> (i32, i32) {
    %c0_i32 = arith.constant 0 : i32
    %c0_i32_0 = arith.constant 0 : i32
    %c0_i32_1 = arith.constant 0 : i32
    return %c0_i32, %c0_i32_0 : i32, i32
  }
  func.func @transform_3(%arg0: i32) -> (i32, i32) {
    %c0_i32 = arith.constant 0 : i32
    %c0_i32_0 = arith.constant 0 : i32
    %c0_i32_1 = arith.constant 0 : i32
    return %c0_i32, %c0_i32_0 : i32, i32
  }
  func.func @transform_4(%arg0: i32) -> (i32, i32) {
    %c0_i32 = arith.constant 0 : i32
    %c0_i32_0 = arith.constant 0 : i32
    %c0_i32_1 = arith.constant 0 : i32
    return %c0_i32, %c0_i32_0 : i32, i32
  }
  func.func @transform_5(%arg0: i32) -> (i32, i32) {
    %c0_i32 = arith.constant 0 : i32
    %c0_i32_0 = arith.constant 0 : i32
    return %c0_i32, %arg0 : i32, i32
  }
}

</mosaic_0001>

<llo_original>
// kernel: tpu_custom_call.1
$region0: #{tpu_custom_call.1}
  #allocation0 [shape = 'u32[]', space=smem, size = 0x4, offset = 0x4, fixed_abs, tag = 'smem constant byte address 0x4 - core index']
  #allocation1 [shape = 'u32[144,128]{1,0:T(1,128)}', space=vmem, size = 0x12000, scoped, tag = 'internal scratch']
  %s0 = inlined_call_operand.vmem [shape: f32[16,256], index: 0, kind: input, shape index: {}]
  %s1 = inlined_call_operand.vmem [shape: f32[64,16], index: 1, kind: input, shape index: {}]
  %s2 = inlined_call_operand.vmem [shape: f32[64,1], index: 2, kind: input, shape index: {}]
  %s3 = inlined_call_operand.vmem [shape: f32[8,64], index: 3, kind: input, shape index: {}]
  %s4 = inlined_call_operand.vmem [shape: f32[8,1], index: 4, kind: input, shape index: {}]
  %s5 = inlined_call_operand.hbm [shape: f32[8,256], index: 5, kind: output, shape index: {}]
  %s6 = sld [smem:[#allocation0]]
  $region91: #{tpu_custom_call.1} parent=0
    _
  %s8 = ssub.s32 1, %s6
  %s9 = scalar_select 0, %s8, %s6
  $region1: #{tpu_custom_call.1} parent=0
    #allocation2 [shape = 'u8[16384]{0}', space=vmem, size = 0x4000, scoped, tag = 'input window, operand 0']
    #allocation3 [shape = 'u8[8192]{0}', space=vmem, size = 0x2000, scoped, tag = 'output window, operand 0']
    #allocation4 [shape = 's32[2]{0}', space=sflag, size = 0x8, scoped, tag = 'scoped memory for tpu_custom_call.1']
    %10 = vsyncpa [#allocation4], 0
    %s11 = scalar_lea.sflag [#allocation4], 1
    %12 = vsyncpa %s11, 0
    loop: start=0, step=1, limit=4
    $region2: #{tpu_custom_call.1} parent=1 // loop_pre_header
      _
    $region3: #{tpu_custom_call.1} parent=1 // loop_header
      %s14 = sphi 0, %s18
      %p15 = scmp.ge.s32.totalorder %s14, 4
      %s24 = sphi 0, %s26
      %s27 = sphi 0, %s24
      %s28 = sphi 0, %s27
      %s44 = sphi 0, %s28
      %s48 = sphi 0, %s48
      %s50 = sphi 0, %s48
      %s51 = sphi 0, %s50
      %s65 = sphi 0, %s51
      %s69 = sphi 0, %s69
      %s71 = sphi 0, %s69
      %s72 = sphi 0, %s71
      %s86 = sphi 0, %s72
      %s90 = sphi 0, %s90
      %s92 = sphi 0, %s90
      %s93 = sphi 0, %s92
      %s107 = sphi 0, %s93
      %s111 = sphi 0, %s111
      %s113 = sphi 0, %s111
      %s114 = sphi 0, %s113
      %s128 = sphi 0, %s114
      %s134 = sphi 0, %s136
      %s137 = sphi 0, %s134
      %s138 = sphi 0, %s137
      %s154 = sphi 0, %s138
    $region4: #{tpu_custom_call.1} parent=1 // loop_header_branch
      %17 = sbr.rel (%p15) target = $region8
    $region5: #{tpu_custom_call.1} parent=1 // loop_body
      %s19 = ssub.s32 %s14, 1
      %s20 = ssub.s32 %s14, 2
      %s21 = sadd.s32 %s14, 1
      %s22 = ssub.s32 %s14, %s21
      %p23 = scmp.eq.s32.totalorder %s22, 0
      %s25 = sadd.s32 %s24, 1
      %s26 = scalar_select %p23, %s24, %s25
      %p29 = pneg %p23
      %p30 = scmp.eq.s32.totalorder %s14, 1
      %p31 = por %p29, %p30
      %p32 = scmp.ne.s32.totalorder %s24, %s27
      %p33 = scmp.eq.s32.totalorder %s14, 0
      %p34 = por %p32, %p33
      %p35 = scmp.ne.s32.totalorder %s24, %s27
      %p36 = scmp.eq.s32.totalorder %s19, 1
      %p37 = por %p35, %p36
      %p38 = scmp.ne.s32.totalorder %s27, %s28
      %p39 = scmp.eq.s32.totalorder %s19, 0
      %p40 = por %p38, %p39
      %p41 = scmp.ne.s32.totalorder %s27, %s28
      %p42 = scmp.eq.s32.totalorder %s20, 1
      %p43 = por %p41, %p42
      %p45 = scmp.ne.s32.totalorder %s28, %s44
      %p46 = scmp.eq.s32.totalorder %s20, 0
      %p47 = por %p45, %p46
      %s49 = sadd.s32 %s48, 1
      %p52 = scmp.eq.s32.totalorder %s14, 1
      %p53 = scmp.ne.s32.totalorder %s48, %s50
      %p54 = scmp.eq.s32.totalorder %s14, 0
      %p55 = por %p53, %p54
      %p56 = scmp.ne.s32.totalorder %s48, %s50
      %p57 = scmp.eq.s32.totalorder %s19, 1
      %p58 = por %p56, %p57
      %p59 = scmp.ne.s32.totalorder %s50, %s51
      %p60 = scmp.eq.s32.totalorder %s19, 0
      %p61 = por %p59, %p60
      %p62 = scmp.ne.s32.totalorder %s50, %s51
      %p63 = scmp.eq.s32.totalorder %s20, 1
      %p64 = por %p62, %p63
      %p66 = scmp.ne.s32.totalorder %s51, %s65
      %p67 = scmp.eq.s32.totalorder %s20, 0
      %p68 = por %p66, %p67
      %s70 = sadd.s32 %s69, 1
      %p73 = scmp.eq.s32.totalorder %s14, 1
      %p74 = scmp.ne.s32.totalorder %s69, %s71
      %p75 = scmp.eq.s32.totalorder %s14, 0
      %p76 = por %p74, %p75
      %p77 = scmp.ne.s32.totalorder %s69, %s71
      %p78 = scmp.eq.s32.totalorder %s19, 1
      %p79 = por %p77, %p78
      %p80 = scmp.ne.s32.totalorder %s71, %s72
      %p81 = scmp.eq.s32.totalorder %s19, 0
      %p82 = por %p80, %p81
      %p83 = scmp.ne.s32.totalorder %s71, %s72
      %p84 = scmp.eq.s32.totalorder %s20, 1
      %p85 = por %p83, %p84
      %p87 = scmp.ne.s32.totalorder %s72, %s86
      %p88 = scmp.eq.s32.totalorder %s20, 0
      %p89 = por %p87, %p88
      %s91 = sadd.s32 %s90, 1
      %p94 = scmp.eq.s32.totalorder %s14, 1
      %p95 = scmp.ne.s32.totalorder %s90, %s92
      %p96 = scmp.eq.s32.totalorder %s14, 0
      %p97 = por %p95, %p96
      %p98 = scmp.ne.s32.totalorder %s90, %s92
      %p99 = scmp.eq.s32.totalorder %s19, 1
      %p100 = por %p98, %p99
      %p101 = scmp.ne.s32.totalorder %s92, %s93
      %p102 = scmp.eq.s32.totalorder %s19, 0
      %p103 = por %p101, %p102
      %p104 = scmp.ne.s32.totalorder %s92, %s93
      %p105 = scmp.eq.s32.totalorder %s20, 1
      %p106 = por %p104, %p105
      %p108 = scmp.ne.s32.totalorder %s93, %s107
      %p109 = scmp.eq.s32.totalorder %s20, 0
      %p110 = por %p108, %p109
      %s112 = sadd.s32 %s111, 1
      %p115 = scmp.eq.s32.totalorder %s14, 1
      %p116 = scmp.ne.s32.totalorder %s111, %s113
      %p117 = scmp.eq.s32.totalorder %s14, 0
      %p118 = por %p116, %p117
      %p119 = scmp.ne.s32.totalorder %s111, %s113
      %p120 = scmp.eq.s32.totalorder %s19, 1
      %p121 = por %p119, %p120
      %p122 = scmp.ne.s32.totalorder %s113, %s114
      %p123 = scmp.eq.s32.totalorder %s19, 0
      %p124 = por %p122, %p123
      %p125 = scmp.ne.s32.totalorder %s113, %s114
      %p126 = scmp.eq.s32.totalorder %s20, 1
      %p127 = por %p125, %p126
      %p129 = scmp.ne.s32.totalorder %s114, %s128
      %p130 = scmp.eq.s32.totalorder %s20, 0
      %p131 = por %p129, %p130
      %s132 = ssub.s32 %s14, %s21
      %p133 = scmp.eq.s32.totalorder %s132, 0
      %s135 = sadd.s32 %s134, 1
      %s136 = scalar_select %p133, %s134, %s135
      %p139 = pneg %p133
      %p140 = scmp.eq.s32.totalorder %s14, 1
      %p141 = por %p139, %p140
      %p142 = scmp.ne.s32.totalorder %s134, %s137
      %p143 = scmp.eq.s32.totalorder %s14, 0
      %p144 = por %p142, %p143
      %p145 = scmp.ne.s32.totalorder %s134, %s137
      %p146 = scmp.eq.s32.totalorder %s19, 1
      %p147 = por %p145, %p146
      %p148 = scmp.ne.s32.totalorder %s137, %s138
      %p149 = scmp.eq.s32.totalorder %s19, 0
      %p150 = por %p148, %p149
      %p151 = scmp.ne.s32.totalorder %s137, %s138
      %p152 = scmp.eq.s32.totalorder %s20, 1
      %p153 = por %p151, %p152
      %p155 = scmp.ne.s32.totalorder %s138, %s154
      %p156 = scmp.eq.s32.totalorder %s20, 0
      %p157 = por %p155, %p156
      %p158 = scmp.le.s32.totalorder 1, %s14
      %p159 = scmp.lt.s32.totalorder %s14, 3
      %p160 = pnand %p158, %p159
      %p161 = pneg %p160
      // Predicated region
      $region9: #{tpu_custom_call.1} parent=5 // pred_check
        _
      $region10: #{tpu_custom_call.1} parent=5 // pred_check_branch
        %163 = sbr.rel (%p160) target = $region12
      $region11: #{tpu_custom_call.1} parent=5 // pred_region
        %s164 = ssub.s32 %s14, 1
        // Predicated region
        $region13: #{tpu_custom_call.1} parent=11 // pred_check
          %p165 = pneg %p61
        $region14: #{tpu_custom_call.1} parent=11 // pred_check_branch
          %167 = sbr.rel (%p165) target = $region16
        $region15: #{tpu_custom_call.1} parent=11 // pred_region
          _
        $region16: #{tpu_custom_call.1} parent=11 // pred_fallthru
          _
        // Predicated region
        $region17: #{tpu_custom_call.1} parent=11 // pred_check
          %p168 = pneg %p82
        $region18: #{tpu_custom_call.1} parent=11 // pred_check_branch
          %170 = sbr.rel (%p168) target = $region20
        $region19: #{tpu_custom_call.1} parent=11 // pred_region
          _
        $region20: #{tpu_custom_call.1} parent=11 // pred_fallthru
          _
        // Predicated region
        $region21: #{tpu_custom_call.1} parent=11 // pred_check
          %p171 = pneg %p103
        $region22: #{tpu_custom_call.1} parent=11 // pred_check_branch
          %173 = sbr.rel (%p171) target = $region24
        $region23: #{tpu_custom_call.1} parent=11 // pred_region
          _
        $region24: #{tpu_custom_call.1} parent=11 // pred_fallthru
          _
        // Predicated region
        $region25: #{tpu_custom_call.1} parent=11 // pred_check
          %p174 = pneg %p124
        $region26: #{tpu_custom_call.1} parent=11 // pred_check_branch
          %176 = sbr.rel (%p174) target = $region28
        $region27: #{tpu_custom_call.1} parent=11 // pred_region
          _
        $region28: #{tpu_custom_call.1} parent=11 // pred_fallthru
          _
      $region12: #{tpu_custom_call.1} parent=5 // pred_fallthru
        _
      %p177 = scmp.lt.s32.totalorder %s14, 2
      // Predicated region
      $region29: #{tpu_custom_call.1} parent=5 // pred_check
        %p178 = pneg %p177
      $region30: #{tpu_custom_call.1} parent=5 // pred_check_branch
        %180 = sbr.rel (%p178) target = $region32
      $region31: #{tpu_custom_call.1} parent=5 // pred_region
        // Predicated region
        $region33: #{tpu_custom_call.1} parent=31 // pred_check
          %p181 = pneg %p34
        $region34: #{tpu_custom_call.1} parent=31 // pred_check_branch
          %183 = sbr.rel (%p181) target = $region36
        $region35: #{tpu_custom_call.1} parent=31 // pred_region
          %s184 = sand.u32 %s24, 1
          %s185 = sand.u32 %s24, 1
          %s186 = smul.addr %s185, 16
          %s187 = scalar_lea.vmem [#allocation2], %s186
          %s188 = smul.addr %s14, 8
          %s189 = scalar_lea.vmem %s0, %s188
          // Predicated region
          $region37: #{tpu_custom_call.1} parent=35 // pred_check
            _
          $region38: #{tpu_custom_call.1} parent=35 // pred_check_branch
            %191 = sbr.rel (0) target = $region40
          $region39: #{tpu_custom_call.1} parent=35 // pred_region
            // Predicated region
            $region41: #{tpu_custom_call.1} parent=39 // pred_check
              _
            $region42: #{tpu_custom_call.1} parent=39 // pred_check_branch
              %193 = sbr.rel (0) target = $region44
            $region43: #{tpu_custom_call.1} parent=39 // pred_region
              // Predicated region
              $region56: #{tpu_custom_call.1} parent=43 // pred_check
                _
              $region57: #{tpu_custom_call.1} parent=43 // pred_check_branch
                %211 = sbr.rel (0) target = $region59
              $region58: #{tpu_custom_call.1} parent=43 // pred_region
                loop: start=0, step=1, limit=1
                $region60: #{tpu_custom_call.1} parent=58 // loop_pre_header
                  _
                $region61: #{tpu_custom_call.1} parent=58 // loop_header
                  %s213 = sphi 0, %s217
                  %p214 = scmp.ge.s32.totalorder %s213, 1
                  %s218 = sphi %s189, %s189
                  %s219 = sphi %s187, %s187
                $region62: #{tpu_custom_call.1} parent=58 // loop_header_branch
                  %216 = sbr.rel (%p214) target = $region66
                $region63: #{tpu_custom_call.1} parent=58 // loop_body
                  %v220 = vld [vmem:[%s218] sm:$0xff]
                  %221 = vst [vmem:[%s219] sm:$0xff] %v220
                  %v222 = vld [vmem:[%s218 + $0x10] sm:$0xff]
                  %223 = vst [vmem:[%s219 + $0x8] sm:$0xff] %v222
                $region64: #{tpu_custom_call.1} parent=58 // loop_footer
                  %s217 = sadd.s32 1, %s213
                $region65: #{tpu_custom_call.1} parent=58 // loop_footer_branch
                  %212 = sbr.rel target = $region61
                $region66: #{tpu_custom_call.1} parent=58 // loop_exit
                  _
              $region59: #{tpu_custom_call.1} parent=43 // pred_fallthru
                _
              // Predicated region
              $region67: #{tpu_custom_call.1} parent=43 // pred_check
                _
              $region68: #{tpu_custom_call.1} parent=43 // pred_check_branch
                %225 = sbr.rel target = $region70
              $region69: #{tpu_custom_call.1} parent=43 // pred_region
                _
              $region70: #{tpu_custom_call.1} parent=43 // pred_fallthru
                _
            $region44: #{tpu_custom_call.1} parent=39 // pred_fallthru
              _
            // Predicated region
            $region45: #{tpu_custom_call.1} parent=39 // pred_check
              _
            $region46: #{tpu_custom_call.1} parent=39 // pred_check_branch
              %195 = sbr.rel target = $region48
            $region47: #{tpu_custom_call.1} parent=39 // pred_region
              %s197 = ssub.s32 256, 1
              loop: start=0, step=1, limit=1
              $region49: #{tpu_custom_call.1} parent=47 // loop_pre_header
                _
              $region50: #{tpu_custom_call.1} parent=47 // loop_header
                %s199 = sphi 0, %s203
                %p200 = scmp.ge.s32.totalorder %s199, 1
                %s204 = sphi %s189, %s189
                %s205 = sphi %s187, %s187
              $region51: #{tpu_custom_call.1} parent=47 // loop_header_branch
                %202 = sbr.rel (%p200) target = $region55
              $region52: #{tpu_custom_call.1} parent=47 // loop_body
                %v206 = vld [vmem:[%s204] sm:%s197]
                %207 = vst [vmem:[%s205] sm:%s197] %v206
                %v208 = vld [vmem:[%s204 + $0x10] sm:%s197]
                %209 = vst [vmem:[%s205 + $0x8] sm:%s197] %v208
              $region53: #{tpu_custom_call.1} parent=47 // loop_footer
                %s203 = sadd.s32 1, %s199
              $region54: #{tpu_custom_call.1} parent=47 // loop_footer_branch
                %198 = sbr.rel target = $region50
              $region55: #{tpu_custom_call.1} parent=47 // loop_exit
                _
            $region48: #{tpu_custom_call.1} parent=39 // pred_fallthru
              _
          $region40: #{tpu_custom_call.1} parent=35 // pred_fallthru
            _
          %226 = vnop
        $region36: #{tpu_custom_call.1} parent=31 // pred_fallthru
          _
      $region32: #{tpu_custom_call.1} parent=5 // pred_fallthru
        _
      %p227 = scmp.le.s32.totalorder 1, %s14
      %p228 = scmp.lt.s32.totalorder %s14, 3
      %p229 = pnand %p227, %p228
      %p230 = pneg %p229
      // Predicated region
      $region71: #{tpu_custom_call.1} parent=5 // pred_check
        _
      $region72: #{tpu_custom_call.1} parent=5 // pred_check_branch
        %232 = sbr.rel (%p229) target = $region74
      $region73: #{tpu_custom_call.1} parent=5 // pred_region
        %s233 = ssub.s32 %s14, 1
        %s234 = sand.u32 %s27, 1
        %s235 = sand.u32 %s27, 1
        %s236 = smul.addr %s235, 16
        %s237 = scalar_lea.vmem [#allocation2], %s236
        // Predicated region
        $region75: #{tpu_custom_call.1} parent=73 // pred_check
          %p238 = pneg %p40
        $region76: #{tpu_custom_call.1} parent=73 // pred_check_branch
          %240 = sbr.rel (%p238) target = $region78
        $region77: #{tpu_custom_call.1} parent=73 // pred_region
          _
        $region78: #{tpu_custom_call.1} parent=73 // pred_fallthru
          _
        %s241 = sand.u32 %s27, 1
        %s242 = sand.u32 %s27, 1
        %s243 = smul.addr %s242, 16
        %s244 = scalar_lea.vmem [#allocation2], %s243
        %p245 = pneg %p40
        %p246 = pneg %p37
        %p247 = pneg %p61
        %p248 = pneg %p58
        %p249 = pneg %p82
        %p250 = pneg %p79
        %p251 = pneg %p103
        %p252 = pneg %p100
        %p253 = pneg %p124
        %p254 = pneg %p121
        %p255 = pneg %p150
        %p256 = pneg %p147
        %s257 = sand.u32 %s137, 1
        %s258 = scalar_lea.sflag [#allocation4], %s257
        %s259 = sand.u32 %s137, 1
        %s260 = smul.addr %s259, 8
        %s261 = scalar_lea.vmem [#allocation3], %s260
        %v262 = vld [vmem:[%s1] sm:$0xff]
        %v263 = vld [vmem:[%s1 + $0x8] sm:$0xff]
        %v264 = vld [vmem:[%s1 + $0x10] sm:$0xff]
        %v265 = vld [vmem:[%s1 + $0x18] sm:$0xff]
        %v266 = vld [vmem:[%s1 + $0x20] sm:$0xff]
        %v267 = vld [vmem:[%s1 + $0x28] sm:$0xff]
        %v268 = vld [vmem:[%s1 + $0x30] sm:$0xff]
        %v269 = vld [vmem:[%s1 + $0x38] sm:$0xff]
        %v270 = vld [vmem:[%s237] sm:$0xff]
        %v271 = vld [vmem:[%s237 + $0x8] sm:$0xff]
        %v272 = vld [vmem:[%s2] sm:$0xff]
        %v273 = vld [vmem:[%s2 + $0x8] sm:$0xff]
        %v274 = vld [vmem:[%s2 + $0x10] sm:$0xff]
        %v275 = vld [vmem:[%s2 + $0x18] sm:$0xff]
        %v276 = vld [vmem:[%s2 + $0x20] sm:$0xff]
        %v277 = vld [vmem:[%s2 + $0x28] sm:$0xff]
        %v278 = vld [vmem:[%s2 + $0x30] sm:$0xff]
        %v279 = vld [vmem:[%s2 + $0x38] sm:$0xff]
        %281 = vset.pattern.permute.xlu0 0
        %282 = vperm.xlu0 %281, %v272
        %v283 = vpop.permute.xlu0 %282
        %286 = vset.pattern.permute.xlu0 0
        %287 = vperm.xlu0 %286, %v273
        %v288 = vpop.permute.xlu0 %287
        %291 = vset.pattern.permute.xlu0 0
        %292 = vperm.xlu0 %291, %v274
        %v293 = vpop.permute.xlu0 %292
        %296 = vset.pattern.permute.xlu0 0
        %297 = vperm.xlu0 %296, %v275
        %v298 = vpop.permute.xlu0 %297
        %301 = vset.pattern.permute.xlu0 0
        %302 = vperm.xlu0 %301, %v276
        %v303 = vpop.permute.xlu0 %302
        %306 = vset.pattern.permute.xlu0 0
        %307 = vperm.xlu0 %306, %v277
        %v308 = vpop.permute.xlu0 %307
        %311 = vset.pattern.permute.xlu0 0
        %312 = vperm.xlu0 %311, %v278
        %v313 = vpop.permute.xlu0 %312
        %316 = vset.pattern.permute.xlu0 0
        %317 = vperm.xlu0 %316, %v279
        %v318 = vpop.permute.xlu0 %317
        %vm320 = vcmask 130048
        %v322 = vsel %vm320, %v262, 0
        %v325 = vsel %vm320, %v263, 0
        %v328 = vsel %vm320, %v264, 0
        %v331 = vsel %vm320, %v265, 0
        %v334 = vsel %vm320, %v266, 0
        %v337 = vsel %vm320, %v267, 0
        %v340 = vsel %vm320, %v268, 0
        %v343 = vsel %vm320, %v269, 0
        %345 = vmatprep.subr.mxu0 0.0
        %346 = vmatpush1.msra.mxu0 0.0
        %347 = vmatprep.subr.mxu0 0.0
        %348 = vmatpush1.msra.mxu0 0.0
        %349 = vmatprep.subr.mxu0 0.0
        %350 = vmatpush1.msra.mxu0 0.0
        %351 = vmatprep.subr.mxu0 0.0
        %352 = vmatpush1.msra.mxu0 0.0
        %353 = vmatprep.subr.mxu0 0.0
        %354 = vmatpush1.msra.mxu0 0.0
        %355 = vmatprep.subr.mxu0 0.0
        %356 = vmatpush1.msra.mxu0 0.0
        %357 = vmatprep.subr.mxu0 0.0
        %358 = vmatpush1.msra.mxu0 0.0
        %359 = vmatprep.subr.mxu0 0.0
        %360 = vmatpush1.msra.mxu0 0.0
        %361 = vmatprep.subr.mxu0 0.0
        %362 = vmatpush1.msra.mxu0 0.0
        %363 = vmatprep.subr.mxu0 0.0
        %364 = vmatpush1.msra.mxu0 0.0
        %365 = vmatprep.subr.mxu0 0.0
        %366 = vmatpush1.msra.mxu0 0.0
        %367 = vmatprep.subr.mxu0 0.0
        %368 = vmatpush1.msra.mxu0 0.0
        %369 = vmatprep.subr.mxu0 0.0
        %370 = vmatpush1.msra.mxu0 0.0
        %371 = vmatprep.subr.mxu0 0.0
        %372 = vmatpush1.msra.mxu0 0.0
        %373 = vmatprep.subr.mxu0 0.0
        %374 = vmatpush1.msra.mxu0 %v271
        %375 = vmatprep.subr.mxu0 0.0
        %376 = vmatpush1.msra.mxu0 %v270
        %377 = vmatprep.subr.mxu0 0.0
        %378 = vmatpush2.msra.mxu0 0.0
        %379 = vmatprep.subr.mxu0 0.0
        %380 = vmatpush2.msra.mxu0 0.0
        %381 = vmatprep.subr.mxu0 0.0
        %382 = vmatpush2.msra.mxu0 0.0
        %383 = vmatprep.subr.mxu0 0.0
        %384 = vmatpush2.msra.mxu0 0.0
        %385 = vmatprep.subr.mxu0 0.0
        %386 = vmatpush2.msra.mxu0 0.0
        %387 = vmatprep.subr.mxu0 0.0
        %388 = vmatpush2.msra.mxu0 0.0
        %389 = vmatprep.subr.mxu0 0.0
        %390 = vmatpush2.msra.mxu0 0.0
        %391 = vmatprep.subr.mxu0 0.0
        %392 = vmatpush2.msra.mxu0 0.0
        %393 = vmatprep.subr.mxu0 0.0
        %394 = vmatpush2.msra.mxu0 0.0
        %395 = vmatprep.subr.mxu0 0.0
        %396 = vmatpush2.msra.mxu0 0.0
        %397 = vmatprep.subr.mxu0 0.0
        %398 = vmatpush2.msra.mxu0 0.0
        %399 = vmatprep.subr.mxu0 0.0
        %400 = vmatpush2.msra.mxu0 0.0
        %401 = vmatprep.subr.mxu0 0.0
        %402 = vmatpush2.msra.mxu0 0.0
        %403 = vmatprep.subr.mxu0 0.0
        %404 = vmatpush2.msra.mxu0 0.0
        %405 = vmatprep.subr.mxu0 0.0
        %406 = vmatpush2.msra.mxu0 0.0
        %407 = vmatprep.subr.mxu0 0.0
        %408 = vmatpush2.msra.mxu0 0.0
        %409 = vmatprep.mubr.f32.mxu0 0.0
        %410 = vmatmul.mubr.f32.gmra.mxu0 %v322
        %v411 = vpop.f32.mrf.mxu0
        %v412 = vadd.f32 %v283, %v411
        %v413 = vpop.f32.mrf.mxu0
        %414 = vmatprep.mubr.f32.mxu0 0.0
        %415 = vmatmul.mubr.f32.gmra.mxu0 %v325
        %v416 = vpop.f32.mrf.mxu0
        %v417 = vadd.f32 %v288, %v416
        %v418 = vpop.f32.mrf.mxu0
        %419 = vmatprep.mubr.f32.mxu0 0.0
        %420 = vmatmul.mubr.f32.gmra.mxu0 %v328
        %v421 = vpop.f32.mrf.mxu0
        %v422 = vadd.f32 %v293, %v421
        %v423 = vpop.f32.mrf.mxu0
        %424 = vmatprep.mubr.f32.mxu0 0.0
        %425 = vmatmul.mubr.f32.gmra.mxu0 %v331
        %v426 = vpop.f32.mrf.mxu0
        %v427 = vadd.f32 %v298, %v426
        %v428 = vpop.f32.mrf.mxu0
        %429 = vmatprep.mubr.f32.mxu0 0.0
        %430 = vmatmul.mubr.f32.gmra.mxu0 %v334
        %v431 = vpop.f32.mrf.mxu0
        %v432 = vadd.f32 %v303, %v431
        %v433 = vpop.f32.mrf.mxu0
        %434 = vmatprep.mubr.f32.mxu0 0.0
        %435 = vmatmul.mubr.f32.gmra.mxu0 %v337
        %v436 = vpop.f32.mrf.mxu0
        %v437 = vadd.f32 %v308, %v436
        %v438 = vpop.f32.mrf.mxu0
        %439 = vmatprep.mubr.f32.mxu0 0.0
        %440 = vmatmul.mubr.f32.gmra.mxu0 %v340
        %v441 = vpop.f32.mrf.mxu0
        %v442 = vadd.f32 %v313, %v441
        %v443 = vpop.f32.mrf.mxu0
        %444 = vmatprep.mubr.f32.mxu0 0.0
        %445 = vmatmul.mubr.f32.gmra.mxu0 %v343
        %v446 = vpop.f32.mrf.mxu0
        %v447 = vadd.f32 %v318, %v446
        %v448 = vpop.f32.mrf.mxu0
        %449 = vdwg.mxu0
        %v450 = vmax.f32 %v412, 0.0
        %v451 = vmax.f32 %v417, 0.0
        %v452 = vmax.f32 %v422, 0.0
        %v453 = vmax.f32 %v427, 0.0
        %v454 = vmax.f32 %v432, 0.0
        %v455 = vmax.f32 %v437, 0.0
        %v456 = vmax.f32 %v442, 0.0
        %v457 = vmax.f32 %v447, 0.0
        %v458 = vld [vmem:[%s3] sm:$0xff]
        %v459 = vld [vmem:[%s4] sm:$0xff]
        %461 = vset.pattern.permute.xlu0 0
        %462 = vperm.xlu0 %461, %v459
        %v463 = vpop.permute.xlu0 %462
        %vm465 = vcmask 523264
        %v467 = vsel %vm465, %v458, 0
        %469 = vmatprep.subr.mxu0 0.0
        %470 = vmatpush1.msra.mxu0 0.0
        %471 = vmatprep.subr.mxu0 0.0
        %472 = vmatpush1.msra.mxu0 0.0
        %473 = vmatprep.subr.mxu0 0.0
        %474 = vmatpush1.msra.mxu0 0.0
        %475 = vmatprep.subr.mxu0 0.0
        %476 = vmatpush1.msra.mxu0 0.0
        %477 = vmatprep.subr.mxu0 0.0
        %478 = vmatpush1.msra.mxu0 0.0
        %479 = vmatprep.subr.mxu0 0.0
        %480 = vmatpush1.msra.mxu0 0.0
        %481 = vmatprep.subr.mxu0 0.0
        %482 = vmatpush1.msra.mxu0 0.0
        %483 = vmatprep.subr.mxu0 0.0
        %484 = vmatpush1.msra.mxu0 0.0
        %485 = vmatprep.subr.mxu0 0.0
        %486 = vmatpush1.msra.mxu0 %v457
        %487 = vmatprep.subr.mxu0 0.0
        %488 = vmatpush1.msra.mxu0 %v456
        %489 = vmatprep.subr.mxu0 0.0
        %490 = vmatpush1.msra.mxu0 %v455
        %491 = vmatprep.subr.mxu0 0.0
        %492 = vmatpush1.msra.mxu0 %v454
        %493 = vmatprep.subr.mxu0 0.0
        %494 = vmatpush1.msra.mxu0 %v453
        %495 = vmatprep.subr.mxu0 0.0
        %496 = vmatpush1.msra.mxu0 %v452
        %497 = vmatprep.subr.mxu0 0.0
        %498 = vmatpush1.msra.mxu0 %v451
        %499 = vmatprep.subr.mxu0 0.0
        %500 = vmatpush1.msra.mxu0 %v450
        %501 = vmatprep.subr.mxu0 0.0
        %502 = vmatpush2.msra.mxu0 0.0
        %503 = vmatprep.subr.mxu0 0.0
        %504 = vmatpush2.msra.mxu0 0.0
        %505 = vmatprep.subr.mxu0 0.0
        %506 = vmatpush2.msra.mxu0 0.0
        %507 = vmatprep.subr.mxu0 0.0
        %508 = vmatpush2.msra.mxu0 0.0
        %509 = vmatprep.subr.mxu0 0.0
        %510 = vmatpush2.msra.mxu0 0.0
        %511 = vmatprep.subr.mxu0 0.0
        %512 = vmatpush2.msra.mxu0 0.0
        %513 = vmatprep.subr.mxu0 0.0
        %514 = vmatpush2.msra.mxu0 0.0
        %515 = vmatprep.subr.mxu0 0.0
        %516 = vmatpush2.msra.mxu0 0.0
        %517 = vmatprep.subr.mxu0 0.0
        %518 = vmatpush2.msra.mxu0 0.0
        %519 = vmatprep.subr.mxu0 0.0
        %520 = vmatpush2.msra.mxu0 0.0
        %521 = vmatprep.subr.mxu0 0.0
        %522 = vmatpush2.msra.mxu0 0.0
        %523 = vmatprep.subr.mxu0 0.0
        %524 = vmatpush2.msra.mxu0 0.0
        %525 = vmatprep.subr.mxu0 0.0
        %526 = vmatpush2.msra.mxu0 0.0
        %527 = vmatprep.subr.mxu0 0.0
        %528 = vmatpush2.msra.mxu0 0.0
        %529 = vmatprep.subr.mxu0 0.0
        %530 = vmatpush2.msra.mxu0 0.0
        %531 = vmatprep.subr.mxu0 0.0
        %532 = vmatpush2.msra.mxu0 0.0
        %533 = vmatprep.mubr.f32.mxu0 0.0
        %534 = vmatmul.mubr.f32.gmra.mxu0 %v467
        %v535 = vpop.f32.mrf.mxu0
        %v536 = vadd.f32 %v463, %v535
        %v537 = vpop.f32.mrf.mxu0
        %538 = vdwg.mxu0
        %539 = vst [vmem:[%s261] sm:$0xff] %v536
        %s540 = sand.u32 %s137, 1
        %s541 = scalar_lea.sflag [#allocation4], %s540
        %s542 = sand.u32 %s137, 1
        %s543 = smul.addr %s542, 8
        %s544 = scalar_lea.vmem [#allocation3], %s543
        // Predicated region
        $region79: #{tpu_custom_call.1} parent=73 // pred_check
          %p545 = pneg %p147
        $region80: #{tpu_custom_call.1} parent=73 // pred_check_branch
          %547 = sbr.rel (%p545) target = $region82
        $region81: #{tpu_custom_call.1} parent=73 // pred_region
          %s549 = ssub.s32 128, 128
          %550 = vsyncadd %s541, %s549
          %s551 = smul.addr %s19, 128
          %s552 = scalar_lea.hbm %s5, %s551
          %s554 = sshll.u32 %s544, 4
          %s555 = int_to_ptr.vmem [resolvable:$true] %s554
          %557 = dma.vmem_to_hbm [thread:$0]  %s555, 128, %s552, %s541
        $region82: #{tpu_custom_call.1} parent=73 // pred_fallthru
          _
      $region74: #{tpu_custom_call.1} parent=5 // pred_fallthru
        _
      %p558 = scmp.le.s32.totalorder 2, %s14
      // Predicated region
      $region83: #{tpu_custom_call.1} parent=5 // pred_check
        %p559 = pneg %p558
      $region84: #{tpu_custom_call.1} parent=5 // pred_check_branch
        %561 = sbr.rel (%p559) target = $region86
      $region85: #{tpu_custom_call.1} parent=5 // pred_region
        %s562 = ssub.s32 %s14, 2
        // Predicated region
        $region87: #{tpu_custom_call.1} parent=85 // pred_check
          %p563 = pneg %p153
        $region88: #{tpu_custom_call.1} parent=85 // pred_check_branch
          %565 = sbr.rel (%p563) target = $region90
        $region89: #{tpu_custom_call.1} parent=85 // pred_region
          %s566 = sand.u32 %s138, 1
          %s567 = scalar_lea.sflag [#allocation4], %s566
          %s568 = sand.u32 %s138, 1
          %s569 = smul.addr %s568, 8
          %s570 = scalar_lea.vmem [#allocation3], %s569
          %571 = dma.done %s567, 128
        $region90: #{tpu_custom_call.1} parent=85 // pred_fallthru
          _
      $region86: #{tpu_custom_call.1} parent=5 // pred_fallthru
        _
    $region6: #{tpu_custom_call.1} parent=1 // loop_footer
      %s18 = sadd.s32 1, %s14
    $region7: #{tpu_custom_call.1} parent=1 // loop_footer_branch
      %13 = sbr.rel target = $region3
    $region8: #{tpu_custom_call.1} parent=1 // loop_exit
      _
    %572 = vsyncpa [#allocation4], 1
    %s573 = scalar_lea.sflag [#allocation4], 1
    %574 = vsyncpa %s573, 1

</llo_original>
